<compile_context>
chip_gen: v5e
topology: v5e:2x2
jax: 0.10.0
libtpu: 0.0.40
codegen_flags: <defaults>
</compile_context>

<pallas_src>
import math

import jax
import jax.numpy as jnp
from jax.experimental import pallas as pl
from jax.experimental.pallas import tpu as pltpu


def _round_up(x, m):
    return ((x + m - 1) // m) * m


def _linear_kernel(x_ref, w_ref, b_ref, o_ref):
    # x_ref: (tm, in_f)   w_ref: (in_f, out_f)   b_ref: (1, out_f)   o_ref: (tm, out_f)
    acc = jnp.dot(x_ref[...], w_ref[...], preferred_element_type=jnp.float32)
    o_ref[...] = (acc + b_ref[...]).astype(o_ref.dtype)


def _choose_tm(B):
    """Pick a batch tile: multiple of 8, capped at 2048, and >=2 tiles when B > 16
    so v7x's two TensorCores both get work."""
    CAP = 2048
    if B <= 16:
        return _round_up(max(B, 1), 8)
    n_tiles = max(2, -(-B // CAP))          # ceil(B / CAP), at least 2
    tm = _round_up(-(-B // n_tiles), 8)     # ceil(B / n_tiles), rounded to sublane
    return min(tm, CAP)


def pallas_linear(x2d, w_t, b2d, *, tm):
    """y = x2d @ w_t + b2d with the batch axis tiled by tm rows (ragged last tile OK).

    x2d:  (B, in_f)        unpadded
    w_t:  (in_f, out_f)    pre-transposed, unpadded
    b2d:  (1, out_f)
    """
    B, in_f = x2d.shape
    out_f = w_t.shape[1]
    grid = (pl.cdiv(B, tm),)

    cost = pl.CostEstimate(
        flops=2 * B * in_f * out_f,
        transcendentals=0,
        bytes_accessed=4 * (B * in_f + in_f * out_f + out_f + B * out_f),
    )

    return pl.pallas_call(
        _linear_kernel,
        out_shape=jax.ShapeDtypeStruct((B, out_f), x2d.dtype),
        grid=grid,
        in_specs=[
            # Full K dim in the block: never rely on OOB reads past the K end.
            pl.BlockSpec((tm, in_f), lambda i: (i, 0)),
            # Constant index_map: weight / bias stay resident in VMEM across tiles.
            pl.BlockSpec((in_f, out_f), lambda i: (0, 0)),
            pl.BlockSpec((1, out_f), lambda i: (0, 0)),
        ],
        out_specs=pl.BlockSpec((tm, out_f), lambda i: (i, 0)),
        compiler_params=pltpu.CompilerParams(
            dimension_semantics=("parallel",),  # batch tiles independent -> megacore on v7x
        ),
        cost_estimate=cost,
    )(x2d, w_t, b2d)


def _make_forward(in_features, out_features, horizon, num_series):
    """Builds the (jit-able) forward: reshape -> pallas matmul -> reshape."""

    def forward(x, w_t, b2d):
        x2d = x.reshape(-1, in_features)
        B = x2d.shape[0]
        tm = _choose_tm(B)
        y = pallas_linear(x2d, w_t, b2d, tm=tm)
        return y.reshape(-1, horizon, num_series)

    return forward


class StupidShitModelPallas:
    def __init__(self, window_size, horizon, num_series, key):
        self.horizon = horizon
        self.num_series = num_series
        self.in_features = window_size * num_series
        self.out_features = num_series * horizon

        # Deterministic init mimicking torch.nn.Linear default:
        # U(-1/sqrt(in_features), 1/sqrt(in_features)) for both weight and bias.
        kw, kb = jax.random.split(key)
        bound = 1.0 / math.sqrt(self.in_features)
        self.weight = jax.random.uniform(
            kw, (self.out_features, self.in_features),
            minval=-bound, maxval=bound, dtype=jnp.float32)
        self.bias = jax.random.uniform(
            kb, (self.out_features,),
            minval=-bound, maxval=bound, dtype=jnp.float32)

        # Pre-transpose the weight ONCE (no per-call HBM transpose); no padding.
        self.w_t = jnp.asarray(self.weight.T)                 # (in_features, out_features)
        self.b2d = self.bias.reshape(1, self.out_features)    # (1, out_features)

        self._forward = jax.jit(
            _make_forward(
                self.in_features, self.out_features,
                self.horizon, self.num_series,
            )
        )

    def __call__(self, x, A, E):
        # A, E are unused, exactly as in the reference forward.
        del A, E
        return self._forward(x, self.w_t, self.b2d)


if __name__ == "__main__":
    window_size = 8
    horizon = 4
    num_series = 4
    batch = 2

    key = jax.random.PRNGKey(0)
    k_model, k_x, k_a, k_e = jax.random.split(key, 4)

    model = StupidShitModelPallas(window_size, horizon, num_series, k_model)

    # x shaped like a (batch, window_size, num_series) time-series window.
    x = jax.random.normal(k_x, (batch, window_size, num_series), dtype=jnp.float32)
    # A, E: placeholder extra inputs (unused by the forward pass).
    A = jax.random.normal(k_a, (num_series, num_series), dtype=jnp.float32)
    E = jax.random.normal(k_e, (num_series, 8), dtype=jnp.float32)

    y = model(x, A, E)
    y = jax.block_until_ready(y)

    # Reference check in plain JAX.
    y_ref = (x.reshape(-1, window_size * num_series) @ model.weight.T + model.bias)
    y_ref = y_ref.reshape(-1, horizon, num_series)
    assert y.shape == (batch, horizon, num_series)
    assert jnp.allclose(y, y_ref, atol=1e-5, rtol=1e-5)

    print("KERNEL_OK")
</pallas_src>

<mosaic_0001>
module attributes {stable_mosaic.version = 11 : i64} {
  func.func @_linear_kernel(%arg0: i32, %arg1: memref<8x32xf32, #tpu.memory_space<vmem>>, %arg2: memref<32x16xf32, #tpu.memory_space<vmem>>, %arg3: memref<1x16xf32, #tpu.memory_space<vmem>>, %arg4: memref<8x16xf32, #tpu.memory_space<vmem>>) attributes {dimension_semantics = [#tpu.dimension_semantics<parallel>], iteration_bounds = array<i64: 1>, scalar_prefetch = 0 : i64, scratch_operands = 0 : i64, tpu.core_type = #tpu.core_type<tc>, window_params = [{transform_indices = @transform_0, window_bounds = array<i64: 8, 32>}, {pipeline_mode = #tpu.pipeline_mode<synchronous>, transform_indices = @transform_1, window_bounds = array<i64: 32, 16>}, {pipeline_mode = #tpu.pipeline_mode<synchronous>, transform_indices = @transform_2, window_bounds = array<i64: 1, 16>}, {transform_indices = @transform_3, window_bounds = array<i64: 8, 16>}]} {
    %c0 = arith.constant 0 : index
    %c0_0 = arith.constant 0 : index
    %0 = vector.load %arg1[%c0, %c0_0] : memref<8x32xf32, #tpu.memory_space<vmem>>, vector<8x32xf32>
    %c0_1 = arith.constant 0 : index
    %c0_2 = arith.constant 0 : index
    %1 = vector.load %arg2[%c0_1, %c0_2] : memref<32x16xf32, #tpu.memory_space<vmem>>, vector<32x16xf32>
    %cst = arith.constant dense<0.000000e+00> : vector<8x16xf32>
    %2 = tpu.matmul %0, %1, %cst {dimension_numbers = #tpu.dot_dimension_numbers<[1], [0], [0], [1], [0, 0, 1, 1], [], []>} : vector<8x32xf32>, vector<32x16xf32>, vector<8x16xf32> -> vector<8x16xf32>
    %c0_3 = arith.constant 0 : index
    %c0_4 = arith.constant 0 : index
    %3 = vector.load %arg3[%c0_3, %c0_4] : memref<1x16xf32, #tpu.memory_space<vmem>>, vector<1x16xf32>
    %4 = vector.broadcast %3 : vector<1x16xf32> to vector<8x16xf32>
    %5 = arith.addf %2, %4 : vector<8x16xf32>
    %c0_5 = arith.constant 0 : index
    %c0_6 = arith.constant 0 : index
    %6 = vector.load %arg4[%c0_5, %c0_6] : memref<8x16xf32, #tpu.memory_space<vmem>>, vector<8x16xf32>
    tpu.vector_store %arg4[%c0_5, %c0_6], %5 {strides = array<i32>} : memref<8x16xf32, #tpu.memory_space<vmem>>, vector<8x16xf32>,
    return
  }
  func.func @transform_0(%arg0: i32) -> (i32, i32) {
    %c0_i32 = arith.constant 0 : i32
    %c0_i32_0 = arith.constant 0 : i32
    return %arg0, %c0_i32 : i32, i32
  }
  func.func @transform_1(%arg0: i32) -> (i32, i32) {
    %c0_i32 = arith.constant 0 : i32
    %c0_i32_0 = arith.constant 0 : i32
    %c0_i32_1 = arith.constant 0 : i32
    return %c0_i32, %c0_i32_0 : i32, i32
  }
  func.func @transform_2(%arg0: i32) -> (i32, i32) {
    %c0_i32 = arith.constant 0 : i32
    %c0_i32_0 = arith.constant 0 : i32
    %c0_i32_1 = arith.constant 0 : i32
    return %c0_i32, %c0_i32_0 : i32, i32
  }
  func.func @transform_3(%arg0: i32) -> (i32, i32) {
    %c0_i32 = arith.constant 0 : i32
    %c0_i32_0 = arith.constant 0 : i32
    return %arg0, %c0_i32 : i32, i32
  }
}

</mosaic_0001>

<llo_original>
// kernel: forward.1
$region0: #{forward.1}
  #allocation0 [shape = 'u32[]', space=smem, size = 0x4, offset = 0x4, fixed_abs, tag = 'smem constant byte address 0x4 - core index']
  #allocation1 [shape = 'u32[72,128]{1,0:T(1,128)}', space=vmem, size = 0x9000, scoped, tag = 'internal scratch']
  %s0 = inlined_call_operand.vmem [shape: f32[2,32], index: 0, kind: input, shape index: {}]
  %s1 = inlined_call_operand.vmem [shape: f32[32,16], index: 1, kind: input, shape index: {}]
  %s2 = inlined_call_operand.vmem [shape: f32[1,16], index: 2, kind: input, shape index: {}]
  %s3 = inlined_call_operand.vmem [shape: f32[2,16], index: 3, kind: output, shape index: {}]
  %s4 = sld [smem:[#allocation0]]
  $region52: #{forward.1} parent=0
    _
  %s6 = ssub.s32 1, %s4
  %s7 = scalar_select 0, %s6, %s4
  $region1: #{forward.1} parent=0
    #allocation2 [shape = 'u8[4096]{0}', space=vmem, size = 0x1000, scoped, tag = 'output window, operand 0, single buffered']
    // Predicated region
    $region2: #{forward.1} parent=1 // pred_check
      _
    $region3: #{forward.1} parent=1 // pred_check_branch
      %9 = sbr.rel (0) target = $region5
    $region4: #{forward.1} parent=1 // pred_region
      _
    $region5: #{forward.1} parent=1 // pred_fallthru
      _
    // Predicated region
    $region6: #{forward.1} parent=1 // pred_check
      _
    $region7: #{forward.1} parent=1 // pred_check_branch
      %11 = sbr.rel (0) target = $region9
    $region8: #{forward.1} parent=1 // pred_region
      _
    $region9: #{forward.1} parent=1 // pred_fallthru
      _
    // Predicated region
    $region10: #{forward.1} parent=1 // pred_check
      _
    $region11: #{forward.1} parent=1 // pred_check_branch
      %13 = sbr.rel (0) target = $region13
    $region12: #{forward.1} parent=1 // pred_region
      _
    $region13: #{forward.1} parent=1 // pred_fallthru
      _
    %v14 = vld [vmem:[%s0] sm:$0xff]
    %v15 = vld [vmem:[%s1] sm:$0xff]
    %v16 = vld [vmem:[%s1 + $0x8] sm:$0xff]
    %v17 = vld [vmem:[%s1 + $0x10] sm:$0xff]
    %v18 = vld [vmem:[%s1 + $0x18] sm:$0xff]
    %v19 = vld [vmem:[%s2] sm:$0x1]
    %v21 = vperm.slane %v19, 0
    %vm23 = vcmask 261120
    %v25 = vsel %vm23, %v14, 0
    %27 = vmatpush.msra.mxu0 0.0
    %28 = vmatpush.msra.mxu0 0.0
    %29 = vmatpush.msra.mxu0 0.0
    %30 = vmatpush.msra.mxu0 0.0
    %31 = vmatpush.msra.mxu0 0.0
    %32 = vmatpush.msra.mxu0 0.0
    %33 = vmatpush.msra.mxu0 0.0
    %34 = vmatpush.msra.mxu0 0.0
    %35 = vmatpush.msra.mxu0 0.0
    %36 = vmatpush.msra.mxu0 0.0
    %37 = vmatpush.msra.mxu0 0.0
    %38 = vmatpush.msra.mxu0 0.0
    %39 = vmatpush.msra.mxu0 %v18
    %40 = vmatpush.msra.mxu0 %v17
    %41 = vmatpush.msra.mxu0 %v16
    %42 = vmatpush.msra.mxu0 %v15
    %43 = vmatmul.f32.gmra.mxu0 %v25
    %v44 = vpop.f32.mrf.mxu0
    %v45 = vadd.f32 %v21, %v44
    %46 = vdwg.mxu0
    %vm47 = vcmask 130048
    %48 = vst.msk [vmem:[#allocation2] sm:$0xff] %vm47, %v45
    // Predicated region
    $region14: #{forward.1} parent=1 // pred_check
      _
    $region15: #{forward.1} parent=1 // pred_check_branch
      %50 = sbr.rel (0) target = $region17
    $region16: #{forward.1} parent=1 // pred_region
      // Predicated region
      $region18: #{forward.1} parent=16 // pred_check
        _
      $region19: #{forward.1} parent=16 // pred_check_branch
        %52 = sbr.rel (0) target = $region21
      $region20: #{forward.1} parent=16 // pred_region
        // Predicated region
        $region22: #{forward.1} parent=20 // pred_check
          _
        $region23: #{forward.1} parent=20 // pred_check_branch
          %54 = sbr.rel target = $region25
        $region24: #{forward.1} parent=20 // pred_region
          // Predicated region
          $region37: #{forward.1} parent=24 // pred_check
            _
          $region38: #{forward.1} parent=24 // pred_check_branch
            %70 = sbr.rel (0) target = $region40
          $region39: #{forward.1} parent=24 // pred_region
            %s72 = ssub.s32 4, 1
            loop: start=0, step=1, limit=1
            $region41: #{forward.1} parent=39 // loop_pre_header
              _
            $region42: #{forward.1} parent=39 // loop_header
              %s74 = sphi 0, %s78
              %p75 = scmp.ge.s32.totalorder %s74, 1
              %s79 = sphi [#allocation2], [#allocation2]
              %s80 = sphi %s3, %s3
            $region43: #{forward.1} parent=39 // loop_header_branch
              %77 = sbr.rel (%p75) target = $region47
            $region44: #{forward.1} parent=39 // loop_body
              %v81 = vld [vmem:[%s79] sm:%s72]
              %82 = vst [vmem:[%s80] sm:%s72] %v81
            $region45: #{forward.1} parent=39 // loop_footer
              %s78 = sadd.s32 1, %s74
            $region46: #{forward.1} parent=39 // loop_footer_branch
              %73 = sbr.rel target = $region42
            $region47: #{forward.1} parent=39 // loop_exit
              _
          $region40: #{forward.1} parent=24 // pred_fallthru
            _
        $region25: #{forward.1} parent=20 // pred_fallthru
          _
        // Predicated region
        $region26: #{forward.1} parent=20 // pred_check
          _
        $region27: #{forward.1} parent=20 // pred_check_branch
          %56 = sbr.rel (0) target = $region29
        $region28: #{forward.1} parent=20 // pred_region
          %s58 = ssub.s32 4, 1
          loop: start=0, step=1, limit=1
          $region30: #{forward.1} parent=28 // loop_pre_header
            _
          $region31: #{forward.1} parent=28 // loop_header
            %s60 = sphi 0, %s64
            %p61 = scmp.ge.s32.totalorder %s60, 1
            %s65 = sphi [#allocation2], [#allocation2]
            %s66 = sphi %s3, %s3
          $region32: #{forward.1} parent=28 // loop_header_branch
            %63 = sbr.rel (%p61) target = $region36
          $region33: #{forward.1} parent=28 // loop_body
            %v67 = vld [vmem:[%s65] sm:%s58]
            %68 = vst [vmem:[%s66] sm:%s58] %v67
          $region34: #{forward.1} parent=28 // loop_footer
            %s64 = sadd.s32 1, %s60
          $region35: #{forward.1} parent=28 // loop_footer_branch
            %59 = sbr.rel target = $region31
          $region36: #{forward.1} parent=28 // loop_exit
            _
        $region29: #{forward.1} parent=20 // pred_fallthru
          _
      $region21: #{forward.1} parent=16 // pred_fallthru
        _
      %83 = vnop
    $region17: #{forward.1} parent=1 // pred_fallthru
      _
    // Predicated region
    $region48: #{forward.1} parent=1 // pred_check
      _
    $region49: #{forward.1} parent=1 // pred_check_branch
      %85 = sbr.rel (0) target = $region51
    $region50: #{forward.1} parent=1 // pred_region
      _
    $region51: #{forward.1} parent=1 // pred_fallthru
      _

</llo_original>
